<compile_context>
chip_gen: v7x
topology: tpu7x:2x2x1
jax: 0.10.0
libtpu: 0.0.40
codegen_flags: <defaults>
</compile_context>

<pallas_src>
import functools

import jax
import jax.numpy as jnp
from jax.experimental import pallas as pl
from jax.experimental.pallas import tpu as pltpu


def _conv_bn_relu_kernel(x_ref, w_ref, shift_ref, mask_ref, o_ref, patch_ref,
                         *, H, W, KH, KW, PH, PW, Cin, CP, NB):
    """NB batch images per grid step.

    x_ref:     (NB, Cin, H*W)        input, spatial flattened into lanes
    w_ref:     (Cout, KH*KW*CP)      packed conv weights * BN scale (zero-padded)
    shift_ref: (Cout, 1)             beta + (conv_bias - running_mean) * scale
    mask_ref:  (KH*KW, 1, H*W) f32   per-tap edge validity masks (0/1)
    o_ref:     (NB, Cout, H*W)       output, lane-dense stores
    patch_ref: (KH*KW*CP, NB*H*W)    f32 VMEM im2col scratch
    """
    HW = H * W
    KK = KH * KW
    pad_rows = CP - Cin
    zpad = jnp.zeros((pad_rows, HW), jnp.float32) if pad_rows else None

    # Build the im2col matrix: one XLU roll + one mask multiply per tap per
    # image, stored as aligned (CP, HW) slabs (pad rows written as zeros, so
    # every scratch element is freshly written each step -- no stale VMEM).
    for b in range(NB):
        x = x_ref[b].astype(jnp.float32)                      # (Cin, HW)
        for t in range(KK):
            dh, dw = divmod(t, KW)
            oh, ow = dh - PH, dw - PW
            d = oh * W + ow                                   # flat tap shift
            if oh == 0 and ow == 0:
                vals = x
            else:
                shifted = pltpu.roll(x, shift=(-d) % HW, axis=1)
                vals = shifted * mask_ref[t]                  # zero halo wrap
            if pad_rows:
                vals = jnp.concatenate([vals, zpad], axis=0)  # (CP, HW)
            patch_ref[t * CP:(t + 1) * CP, b * HW:(b + 1) * HW] = vals

    # Single MXU push: (Cout, K) @ (K, NB*HW), f32 accumulation.
    acc = jnp.dot(w_ref[...], patch_ref[...],
                  preferred_element_type=jnp.float32)

    # BN scale already folded into the weights: epilogue is add + ReLU.
    y = jnp.maximum(acc + shift_ref[...], 0.0)

    # Lane-dense writebacks at multiples of HW.
    for b in range(NB):
        o_ref[b] = y[:, b * HW:(b + 1) * HW].astype(o_ref.dtype)


def _choose_nb(N, Cin, Cout, HW, K, budget_bytes=20 * 1024 * 1024):
    """Images per grid step: amortize per-step pipeline overhead, but keep the
    grid >= 2 steps (so v7x can split the 'parallel' axis across its two
    TensorCores) and stay under a per-step VMEM budget (double-buffered
    input/output blocks + the im2col scratch)."""
    per_image = 4 * HW * (2 * Cin + 2 * Cout + K)
    nb = 1
    for cand in range(1, N + 1):
        if N % cand:
            continue
        if N >= 2 and N // cand < 2:
            continue
        if cand * per_image <= budget_bytes:
            nb = cand
    return nb


@jax.jit
def conv_block_forward(x_nchw, weight_oihw, bias, gamma, beta,
                       running_mean, running_var, eps=1e-5):
    """conv_block forward.  x_nchw: (N, Cin, H, W) -> (N, Cout, H, W)."""
    N, Cin, H, W = x_nchw.shape
    Cout, _, KH, KW = weight_oihw.shape
    PH, PW = (KH - 1) // 2, (KW - 1) // 2          # padding=(1,1) for 3x3
    HW = H * W
    CP = ((Cin + 7) // 8) * 8                      # sublane-aligned tap slot
    K = KH * KW * CP
    NB = _choose_nb(N, Cin, Cout, HW, K)

    # Activations: free contiguous reshape only (no transpose, no jnp.pad).
    x_flat = x_nchw.reshape(N, Cin, HW)

    # Fold conv bias + inference BatchNorm into a per-channel affine, and fold
    # the scale straight into the packed weights (tiny tensor, folded once).
    scale = gamma / jnp.sqrt(running_var + eps)
    shift = beta + (bias - running_mean) * scale

    # (Cout, Cin, KH, KW) -> (Cout, KH*KW*CP), zero-padding Cin -> CP per tap.
    w_taps = jnp.transpose(weight_oihw, (2, 3, 0, 1)).reshape(KH * KW, Cout, Cin)
    w_taps = jnp.pad(w_taps, ((0, 0), (0, 0), (0, CP - Cin)))
    w_packed = jnp.transpose(w_taps, (1, 0, 2)).reshape(Cout, K)
    w_packed = (w_packed * scale[:, None]).astype(jnp.float32)

    # Image-invariant per-tap edge-validity masks (resident, ~KH*KW*HW*4 B).
    hw_idx = jnp.arange(HW, dtype=jnp.int32)
    row, col = hw_idx // W, hw_idx % W
    masks = []
    for dh in range(KH):
        for dw in range(KW):
            oh, ow = dh - PH, dw - PW
            masks.append((row + oh >= 0) & (row + oh < H) &
                         (col + ow >= 0) & (col + ow < W))
    taps_mask = jnp.stack(masks).astype(jnp.float32).reshape(KH * KW, 1, HW)

    kernel = functools.partial(_conv_bn_relu_kernel, H=H, W=W, KH=KH, KW=KW,
                               PH=PH, PW=PW, Cin=Cin, CP=CP, NB=NB)

    out_flat = pl.pallas_call(
        kernel,
        out_shape=jax.ShapeDtypeStruct((N, Cout, HW), x_nchw.dtype),
        grid_spec=pltpu.PrefetchScalarGridSpec(
            num_scalar_prefetch=0,
            grid=(N // NB,),
            in_specs=[
                pl.BlockSpec((NB, Cin, HW), lambda n: (n, 0, 0)),
                pl.BlockSpec((Cout, K), lambda n: (0, 0)),
                pl.BlockSpec((Cout, 1), lambda n: (0, 0)),
                pl.BlockSpec((KH * KW, 1, HW), lambda n: (0, 0, 0)),
            ],
            out_specs=pl.BlockSpec((NB, Cout, HW), lambda n: (n, 0, 0)),
            scratch_shapes=[pltpu.VMEM((K, NB * HW), jnp.float32)],
        ),
        compiler_params=pltpu.CompilerParams(
            dimension_semantics=("parallel",),
            vmem_limit_bytes=48 * 1024 * 1024),
    )(x_flat, w_packed,
      shift.astype(jnp.float32).reshape(Cout, 1),
      taps_mask)

    # (N, Cout, H*W) -> (N, Cout, H, W): free reshape, already NCHW.
    return out_flat.reshape(N, Cout, H, W)


def _reference(x_nchw, weight_oihw, bias, gamma, beta, rm, rv, eps=1e-5):
    """Plain-JAX reference (lax conv) for the correctness check."""
    y = jax.lax.conv_general_dilated(
        x_nchw, weight_oihw, window_strides=(1, 1), padding=((1, 1), (1, 1)),
        dimension_numbers=("NCHW", "OIHW", "NCHW"))
    y = y + bias[None, :, None, None]
    y = (y - rm[None, :, None, None]) / jnp.sqrt(rv[None, :, None, None] + eps)
    y = y * gamma[None, :, None, None] + beta[None, :, None, None]
    return jnp.maximum(y, 0.0)


if __name__ == "__main__":
    # Small deterministic example: in_features=4, out_features=8, 16x16 spatial.
    N, Cin, Cout, H, W = 2, 4, 8, 16, 16
    key = jax.random.PRNGKey(0)
    kx, kw, kb, kg, kbe, km, kv = jax.random.split(key, 7)

    x = jax.random.normal(kx, (N, Cin, H, W), jnp.float32)
    weight = jax.random.normal(kw, (Cout, Cin, 3, 3), jnp.float32) * 0.1
    bias = jax.random.normal(kb, (Cout,), jnp.float32) * 0.1
    gamma = 1.0 + 0.1 * jax.random.normal(kg, (Cout,), jnp.float32)
    beta = 0.1 * jax.random.normal(kbe, (Cout,), jnp.float32)
    running_mean = 0.1 * jax.random.normal(km, (Cout,), jnp.float32)
    running_var = 1.0 + 0.1 * jax.nn.softplus(
        jax.random.normal(kv, (Cout,), jnp.float32))

    out = conv_block_forward(x, weight, bias, gamma, beta,
                             running_mean, running_var)
    out = jax.block_until_ready(out)

    ref = _reference(x, weight, bias, gamma, beta, running_mean, running_var)
    assert out.shape == (N, Cout, H, W)
    assert jnp.allclose(out, ref, atol=1e-4, rtol=1e-4)

    print("KERNEL_OK")
</pallas_src>

<mosaic_0001>
module attributes {stable_mosaic.version = 11 : i64} {
  func.func @_conv_bn_relu_kernel(%arg0: i32, %arg1: memref<1x4x256xf32, #tpu.memory_space<vmem>>, %arg2: memref<8x72xf32, #tpu.memory_space<vmem>>, %arg3: memref<8x1xf32, #tpu.memory_space<vmem>>, %arg4: memref<9x1x256xf32, #tpu.memory_space<vmem>>, %arg5: memref<1x8x256xf32, #tpu.memory_space<vmem>>, %arg6: memref<72x256xf32, #tpu.memory_space<vmem>>) attributes {dimension_semantics = [#tpu.dimension_semantics<parallel>], iteration_bounds = array<i64: 2>, scalar_prefetch = 0 : i64, scratch_operands = 1 : i64, tpu.core_type = #tpu.core_type<tc>, window_params = [{transform_indices = @transform_0, window_bounds = array<i64: 1, 4, 256>}, {pipeline_mode = #tpu.pipeline_mode<synchronous>, transform_indices = @transform_1, window_bounds = array<i64: 8, 72>}, {pipeline_mode = #tpu.pipeline_mode<synchronous>, transform_indices = @transform_2, window_bounds = array<i64: 8, 1>}, {pipeline_mode = #tpu.pipeline_mode<synchronous>, transform_indices = @transform_3, window_bounds = array<i64: 9, 1, 256>}, {transform_indices = @transform_4, window_bounds = array<i64: 1, 8, 256>}]} {
    %cst = arith.constant 0.000000e+00 : f32
    %0 = vector.broadcast %cst : f32 to vector<4x256xf32>
    %c0 = arith.constant 0 : index
    %c0_0 = arith.constant 0 : index
    %c0_1 = arith.constant 0 : index
    %1 = vector.load %arg1[%c0, %c0_0, %c0_1] : memref<1x4x256xf32, #tpu.memory_space<vmem>>, vector<1x4x256xf32>
    %2 = vector.shape_cast %1 : vector<1x4x256xf32> to vector<4x256xf32>
    %c17_i32 = arith.constant 17 : i32
    %3 = tpu.dynamic_rotate %2 by %c17_i32 dim 1 : vector<4x256xf32>, i32 -> vector<4x256xf32>
    %c0_2 = arith.constant 0 : index
    %c0_3 = arith.constant 0 : index
    %c0_4 = arith.constant 0 : index
    %4 = vector.load %arg4[%c0_2, %c0_3, %c0_4] : memref<9x1x256xf32, #tpu.memory_space<vmem>>, vector<1x1x256xf32>
    %5 = vector.shape_cast %4 : vector<1x1x256xf32> to vector<1x256xf32>
    %6 = vector.broadcast %5 : vector<1x256xf32> to vector<4x256xf32>
    %7 = arith.mulf %3, %6 : vector<4x256xf32>
    %8 = tpu.concatenate %7, %0 in 0 : vector<4x256xf32>, vector<4x256xf32> -> vector<8x256xf32>
    %c0_5 = arith.constant 0 : index
    %c0_6 = arith.constant 0 : index
    %9 = vector.load %arg6[%c0_5, %c0_6] : memref<72x256xf32, #tpu.memory_space<vmem>>, vector<8x256xf32>
    tpu.vector_store %arg6[%c0_5, %c0_6], %8 {strides = array<i32>} : memref<72x256xf32, #tpu.memory_space<vmem>>, vector<8x256xf32>,
    %c16_i32 = arith.constant 16 : i32
    %10 = tpu.dynamic_rotate %2 by %c16_i32 dim 1 : vector<4x256xf32>, i32 -> vector<4x256xf32>
    %c1 = arith.constant 1 : index
    %c0_7 = arith.constant 0 : index
    %c0_8 = arith.constant 0 : index
    %11 = vector.load %arg4[%c1, %c0_7, %c0_8] : memref<9x1x256xf32, #tpu.memory_space<vmem>>, vector<1x1x256xf32>
    %12 = vector.shape_cast %11 : vector<1x1x256xf32> to vector<1x256xf32>
    %13 = vector.broadcast %12 : vector<1x256xf32> to vector<4x256xf32>
    %14 = arith.mulf %10, %13 : vector<4x256xf32>
    %15 = tpu.concatenate %14, %0 in 0 : vector<4x256xf32>, vector<4x256xf32> -> vector<8x256xf32>
    %c8 = arith.constant 8 : index
    %c0_9 = arith.constant 0 : index
    %16 = vector.load %arg6[%c8, %c0_9] : memref<72x256xf32, #tpu.memory_space<vmem>>, vector<8x256xf32>
    tpu.vector_store %arg6[%c8, %c0_9], %15 {strides = array<i32>} : memref<72x256xf32, #tpu.memory_space<vmem>>, vector<8x256xf32>,
    %c15_i32 = arith.constant 15 : i32
    %17 = tpu.dynamic_rotate %2 by %c15_i32 dim 1 : vector<4x256xf32>, i32 -> vector<4x256xf32>
    %c2 = arith.constant 2 : index
    %c0_10 = arith.constant 0 : index
    %c0_11 = arith.constant 0 : index
    %18 = vector.load %arg4[%c2, %c0_10, %c0_11] : memref<9x1x256xf32, #tpu.memory_space<vmem>>, vector<1x1x256xf32>
    %19 = vector.shape_cast %18 : vector<1x1x256xf32> to vector<1x256xf32>
    %20 = vector.broadcast %19 : vector<1x256xf32> to vector<4x256xf32>
    %21 = arith.mulf %17, %20 : vector<4x256xf32>
    %22 = tpu.concatenate %21, %0 in 0 : vector<4x256xf32>, vector<4x256xf32> -> vector<8x256xf32>
    %c16 = arith.constant 16 : index
    %c0_12 = arith.constant 0 : index
    %23 = vector.load %arg6[%c16, %c0_12] : memref<72x256xf32, #tpu.memory_space<vmem>>, vector<8x256xf32>
    tpu.vector_store %arg6[%c16, %c0_12], %22 {strides = array<i32>} : memref<72x256xf32, #tpu.memory_space<vmem>>, vector<8x256xf32>,
    %c1_i32 = arith.constant 1 : i32
    %24 = tpu.dynamic_rotate %2 by %c1_i32 dim 1 : vector<4x256xf32>, i32 -> vector<4x256xf32>
    %c3 = arith.constant 3 : index
    %c0_13 = arith.constant 0 : index
    %c0_14 = arith.constant 0 : index
    %25 = vector.load %arg4[%c3, %c0_13, %c0_14] : memref<9x1x256xf32, #tpu.memory_space<vmem>>, vector<1x1x256xf32>
    %26 = vector.shape_cast %25 : vector<1x1x256xf32> to vector<1x256xf32>
    %27 = vector.broadcast %26 : vector<1x256xf32> to vector<4x256xf32>
    %28 = arith.mulf %24, %27 : vector<4x256xf32>
    %29 = tpu.concatenate %28, %0 in 0 : vector<4x256xf32>, vector<4x256xf32> -> vector<8x256xf32>
    %c24 = arith.constant 24 : index
    %c0_15 = arith.constant 0 : index
    %30 = vector.load %arg6[%c24, %c0_15] : memref<72x256xf32, #tpu.memory_space<vmem>>, vector<8x256xf32>
    tpu.vector_store %arg6[%c24, %c0_15], %29 {strides = array<i32>} : memref<72x256xf32, #tpu.memory_space<vmem>>, vector<8x256xf32>,
    %31 = tpu.concatenate %2, %0 in 0 : vector<4x256xf32>, vector<4x256xf32> -> vector<8x256xf32>
    %c32 = arith.constant 32 : index
    %c0_16 = arith.constant 0 : index
    %32 = vector.load %arg6[%c32, %c0_16] : memref<72x256xf32, #tpu.memory_space<vmem>>, vector<8x256xf32>
    tpu.vector_store %arg6[%c32, %c0_16], %31 {strides = array<i32>} : memref<72x256xf32, #tpu.memory_space<vmem>>, vector<8x256xf32>,
    %c255_i32 = arith.constant 255 : i32
    %33 = tpu.dynamic_rotate %2 by %c255_i32 dim 1 : vector<4x256xf32>, i32 -> vector<4x256xf32>
    %c5 = arith.constant 5 : index
    %c0_17 = arith.constant 0 : index
    %c0_18 = arith.constant 0 : index
    %34 = vector.load %arg4[%c5, %c0_17, %c0_18] : memref<9x1x256xf32, #tpu.memory_space<vmem>>, vector<1x1x256xf32>
    %35 = vector.shape_cast %34 : vector<1x1x256xf32> to vector<1x256xf32>
    %36 = vector.broadcast %35 : vector<1x256xf32> to vector<4x256xf32>
    %37 = arith.mulf %33, %36 : vector<4x256xf32>
    %38 = tpu.concatenate %37, %0 in 0 : vector<4x256xf32>, vector<4x256xf32> -> vector<8x256xf32>
    %c40 = arith.constant 40 : index
    %c0_19 = arith.constant 0 : index
    %39 = vector.load %arg6[%c40, %c0_19] : memref<72x256xf32, #tpu.memory_space<vmem>>, vector<8x256xf32>
    tpu.vector_store %arg6[%c40, %c0_19], %38 {strides = array<i32>} : memref<72x256xf32, #tpu.memory_space<vmem>>, vector<8x256xf32>,
    %c241_i32 = arith.constant 241 : i32
    %40 = tpu.dynamic_rotate %2 by %c241_i32 dim 1 : vector<4x256xf32>, i32 -> vector<4x256xf32>
    %c6 = arith.constant 6 : index
    %c0_20 = arith.constant 0 : index
    %c0_21 = arith.constant 0 : index
    %41 = vector.load %arg4[%c6, %c0_20, %c0_21] : memref<9x1x256xf32, #tpu.memory_space<vmem>>, vector<1x1x256xf32>
    %42 = vector.shape_cast %41 : vector<1x1x256xf32> to vector<1x256xf32>
    %43 = vector.broadcast %42 : vector<1x256xf32> to vector<4x256xf32>
    %44 = arith.mulf %40, %43 : vector<4x256xf32>
    %45 = tpu.concatenate %44, %0 in 0 : vector<4x256xf32>, vector<4x256xf32> -> vector<8x256xf32>
    %c48 = arith.constant 48 : index
    %c0_22 = arith.constant 0 : index
    %46 = vector.load %arg6[%c48, %c0_22] : memref<72x256xf32, #tpu.memory_space<vmem>>, vector<8x256xf32>
    tpu.vector_store %arg6[%c48, %c0_22], %45 {strides = array<i32>} : memref<72x256xf32, #tpu.memory_space<vmem>>, vector<8x256xf32>,
    %c240_i32 = arith.constant 240 : i32
    %47 = tpu.dynamic_rotate %2 by %c240_i32 dim 1 : vector<4x256xf32>, i32 -> vector<4x256xf32>
    %c7 = arith.constant 7 : index
    %c0_23 = arith.constant 0 : index
    %c0_24 = arith.constant 0 : index
    %48 = vector.load %arg4[%c7, %c0_23, %c0_24] : memref<9x1x256xf32, #tpu.memory_space<vmem>>, vector<1x1x256xf32>
    %49 = vector.shape_cast %48 : vector<1x1x256xf32> to vector<1x256xf32>
    %50 = vector.broadcast %49 : vector<1x256xf32> to vector<4x256xf32>
    %51 = arith.mulf %47, %50 : vector<4x256xf32>
    %52 = tpu.concatenate %51, %0 in 0 : vector<4x256xf32>, vector<4x256xf32> -> vector<8x256xf32>
    %c56 = arith.constant 56 : index
    %c0_25 = arith.constant 0 : index
    %53 = vector.load %arg6[%c56, %c0_25] : memref<72x256xf32, #tpu.memory_space<vmem>>, vector<8x256xf32>
    tpu.vector_store %arg6[%c56, %c0_25], %52 {strides = array<i32>} : memref<72x256xf32, #tpu.memory_space<vmem>>, vector<8x256xf32>,
    %c239_i32 = arith.constant 239 : i32
    %54 = tpu.dynamic_rotate %2 by %c239_i32 dim 1 : vector<4x256xf32>, i32 -> vector<4x256xf32>
    %c8_26 = arith.constant 8 : index
    %c0_27 = arith.constant 0 : index
    %c0_28 = arith.constant 0 : index
    %55 = vector.load %arg4[%c8_26, %c0_27, %c0_28] : memref<9x1x256xf32, #tpu.memory_space<vmem>>, vector<1x1x256xf32>
    %56 = vector.shape_cast %55 : vector<1x1x256xf32> to vector<1x256xf32>
    %57 = vector.broadcast %56 : vector<1x256xf32> to vector<4x256xf32>
    %58 = arith.mulf %54, %57 : vector<4x256xf32>
    %59 = tpu.concatenate %58, %0 in 0 : vector<4x256xf32>, vector<4x256xf32> -> vector<8x256xf32>
    %c64 = arith.constant 64 : index
    %c0_29 = arith.constant 0 : index
    %60 = vector.load %arg6[%c64, %c0_29] : memref<72x256xf32, #tpu.memory_space<vmem>>, vector<8x256xf32>
    tpu.vector_store %arg6[%c64, %c0_29], %59 {strides = array<i32>} : memref<72x256xf32, #tpu.memory_space<vmem>>, vector<8x256xf32>,
    %c0_30 = arith.constant 0 : index
    %c0_31 = arith.constant 0 : index
    %61 = vector.load %arg2[%c0_30, %c0_31] : memref<8x72xf32, #tpu.memory_space<vmem>>, vector<8x72xf32>
    %c0_32 = arith.constant 0 : index
    %c0_33 = arith.constant 0 : index
    %62 = vector.load %arg6[%c0_32, %c0_33] : memref<72x256xf32, #tpu.memory_space<vmem>>, vector<72x256xf32>
    %cst_34 = arith.constant dense<0.000000e+00> : vector<8x256xf32>
    %63 = tpu.matmul %61, %62, %cst_34 {dimension_numbers = #tpu.dot_dimension_numbers<[1], [0], [0], [1], [0, 0, 1, 1], [], []>} : vector<8x72xf32>, vector<72x256xf32>, vector<8x256xf32> -> vector<8x256xf32>
    %c0_35 = arith.constant 0 : index
    %c0_36 = arith.constant 0 : index
    %64 = vector.load %arg3[%c0_35, %c0_36] : memref<8x1xf32, #tpu.memory_space<vmem>>, vector<8x1xf32>
    %65 = vector.broadcast %64 : vector<8x1xf32> to vector<8x256xf32>
    %66 = arith.addf %63, %65 : vector<8x256xf32>
    %cst_37 = arith.constant 0.000000e+00 : f32
    %67 = vector.broadcast %cst_37 : f32 to vector<8x256xf32>
    %68 = arith.maximumf %66, %67 : vector<8x256xf32>
    %c0_38 = arith.constant 0 : index
    %c0_39 = arith.constant 0 : index
    %c0_40 = arith.constant 0 : index
    %69 = vector.load %arg5[%c0_38, %c0_39, %c0_40] : memref<1x8x256xf32, #tpu.memory_space<vmem>>, vector<1x8x256xf32>
    %70 = vector.shape_cast %69 : vector<1x8x256xf32> to vector<8x256xf32>
    %71 = vector.shape_cast %68 : vector<8x256xf32> to vector<1x8x256xf32>
    tpu.vector_store %arg5[%c0_38, %c0_39, %c0_40], %71 {strides = array<i32>} : memref<1x8x256xf32, #tpu.memory_space<vmem>>, vector<1x8x256xf32>,
    return
  }
  func.func @transform_0(%arg0: i32) -> (i32, i32, i32) {
    %c0_i32 = arith.constant 0 : i32
    %c0_i32_0 = arith.constant 0 : i32
    %c0_i32_1 = arith.constant 0 : i32
    return %arg0, %c0_i32, %c0_i32_0 : i32, i32, i32
  }
  func.func @transform_1(%arg0: i32) -> (i32, i32) {
    %c0_i32 = arith.constant 0 : i32
    %c0_i32_0 = arith.constant 0 : i32
    %c0_i32_1 = arith.constant 0 : i32
    return %c0_i32, %c0_i32_0 : i32, i32
  }
  func.func @transform_2(%arg0: i32) -> (i32, i32) {
    %c0_i32 = arith.constant 0 : i32
    %c0_i32_0 = arith.constant 0 : i32
    %c0_i32_1 = arith.constant 0 : i32
    return %c0_i32, %c0_i32_0 : i32, i32
  }
  func.func @transform_3(%arg0: i32) -> (i32, i32, i32) {
    %c0_i32 = arith.constant 0 : i32
    %c0_i32_0 = arith.constant 0 : i32
    %c0_i32_1 = arith.constant 0 : i32
    %c0_i32_2 = arith.constant 0 : i32
    return %c0_i32, %c0_i32_0, %c0_i32_1 : i32, i32, i32
  }
  func.func @transform_4(%arg0: i32) -> (i32, i32, i32) {
    %c0_i32 = arith.constant 0 : i32
    %c0_i32_0 = arith.constant 0 : i32
    %c0_i32_1 = arith.constant 0 : i32
    return %arg0, %c0_i32, %c0_i32_0 : i32, i32, i32
  }
}

</mosaic_0001>

<llo_original>
// kernel: conv_block_forward.1
$region0: #{conv_block_forward.1}
  #allocation0 [shape = 'u32[]', space=smem, size = 0x4, offset = 0x4, fixed_abs, tag = 'smem constant byte address 0x4 - core index']
  #allocation1 [shape = 'u32[144,128]{1,0:T(1,128)}', space=vmem, size = 0x12000, scoped, tag = 'internal scratch']
  #allocation2 [shape = 'f32[72,256]{1,0:T(8,128)}', space=vmem, size = 0x12000, scoped, tag = 'scratch operand']
  %s0 = inlined_call_operand.vmem [shape: f32[2,4,256], index: 0, kind: input, shape index: {}]
  %s1 = inlined_call_operand.vmem [shape: f32[8,72], index: 1, kind: input, shape index: {}]
  %s2 = inlined_call_operand.vmem [shape: f32[8,1], index: 2, kind: input, shape index: {}]
  %s3 = inlined_call_operand.vmem [shape: f32[9,1,256], index: 3, kind: input, shape index: {}]
  %s4 = inlined_call_operand.vmem [shape: f32[2,8,256], index: 4, kind: output, shape index: {}]
  %s5 = sld [smem:[#allocation0]]
  $region49: #{conv_block_forward.1} parent=0
    _
  %s7 = ssub.s32 1, %s5
  %s8 = scalar_select 0, %s7, %s5
  loop: start=0, step=1, limit=4
  $region2: #{conv_block_forward.1} parent=0 // loop_pre_header
    _
  $region3: #{conv_block_forward.1} parent=0 // loop_header
    %s10 = sphi 0, %s14
    %p11 = scmp.ge.s32.totalorder %s10, 4
    %s20 = sphi 0, %s22
    %s23 = sphi 0, %s20
    %s24 = sphi 0, %s23
    %s40 = sphi 0, %s24
    %s44 = sphi 0, %s44
    %s46 = sphi 0, %s44
    %s47 = sphi 0, %s46
    %s61 = sphi 0, %s47
    %s65 = sphi 0, %s65
    %s67 = sphi 0, %s65
    %s68 = sphi 0, %s67
    %s82 = sphi 0, %s68
    %s86 = sphi 0, %s86
    %s88 = sphi 0, %s86
    %s89 = sphi 0, %s88
    %s103 = sphi 0, %s89
    %s109 = sphi 0, %s111
    %s112 = sphi 0, %s109
    %s113 = sphi 0, %s112
    %s129 = sphi 0, %s113
  $region4: #{conv_block_forward.1} parent=0 // loop_header_branch
    %13 = sbr.rel (%p11) target = $region8
  $region5: #{conv_block_forward.1} parent=0 // loop_body
    %s15 = ssub.s32 %s10, 1
    %s16 = ssub.s32 %s10, 2
    %s17 = sadd.s32 %s10, 1
    %s18 = ssub.s32 %s10, %s17
    %p19 = scmp.eq.s32.totalorder %s18, 0
    %s21 = sadd.s32 %s20, 1
    %s22 = scalar_select %p19, %s20, %s21
    %p25 = pneg %p19
    %p26 = scmp.eq.s32.totalorder %s10, 1
    %p27 = por %p25, %p26
    %p28 = scmp.ne.s32.totalorder %s20, %s23
    %p29 = scmp.eq.s32.totalorder %s10, 0
    %p30 = por %p28, %p29
    %p31 = scmp.ne.s32.totalorder %s20, %s23
    %p32 = scmp.eq.s32.totalorder %s15, 1
    %p33 = por %p31, %p32
    %p34 = scmp.ne.s32.totalorder %s23, %s24
    %p35 = scmp.eq.s32.totalorder %s15, 0
    %p36 = por %p34, %p35
    %p37 = scmp.ne.s32.totalorder %s23, %s24
    %p38 = scmp.eq.s32.totalorder %s16, 1
    %p39 = por %p37, %p38
    %p41 = scmp.ne.s32.totalorder %s24, %s40
    %p42 = scmp.eq.s32.totalorder %s16, 0
    %p43 = por %p41, %p42
    %s45 = sadd.s32 %s44, 1
    %p48 = scmp.eq.s32.totalorder %s10, 1
    %p49 = scmp.ne.s32.totalorder %s44, %s46
    %p50 = scmp.eq.s32.totalorder %s10, 0
    %p51 = por %p49, %p50
    %p52 = scmp.ne.s32.totalorder %s44, %s46
    %p53 = scmp.eq.s32.totalorder %s15, 1
    %p54 = por %p52, %p53
    %p55 = scmp.ne.s32.totalorder %s46, %s47
    %p56 = scmp.eq.s32.totalorder %s15, 0
    %p57 = por %p55, %p56
    %p58 = scmp.ne.s32.totalorder %s46, %s47
    %p59 = scmp.eq.s32.totalorder %s16, 1
    %p60 = por %p58, %p59
    %p62 = scmp.ne.s32.totalorder %s47, %s61
    %p63 = scmp.eq.s32.totalorder %s16, 0
    %p64 = por %p62, %p63
    %s66 = sadd.s32 %s65, 1
    %p69 = scmp.eq.s32.totalorder %s10, 1
    %p70 = scmp.ne.s32.totalorder %s65, %s67
    %p71 = scmp.eq.s32.totalorder %s10, 0
    %p72 = por %p70, %p71
    %p73 = scmp.ne.s32.totalorder %s65, %s67
    %p74 = scmp.eq.s32.totalorder %s15, 1
    %p75 = por %p73, %p74
    %p76 = scmp.ne.s32.totalorder %s67, %s68
    %p77 = scmp.eq.s32.totalorder %s15, 0
    %p78 = por %p76, %p77
    %p79 = scmp.ne.s32.totalorder %s67, %s68
    %p80 = scmp.eq.s32.totalorder %s16, 1
    %p81 = por %p79, %p80
    %p83 = scmp.ne.s32.totalorder %s68, %s82
    %p84 = scmp.eq.s32.totalorder %s16, 0
    %p85 = por %p83, %p84
    %s87 = sadd.s32 %s86, 1
    %p90 = scmp.eq.s32.totalorder %s10, 1
    %p91 = scmp.ne.s32.totalorder %s86, %s88
    %p92 = scmp.eq.s32.totalorder %s10, 0
    %p93 = por %p91, %p92
    %p94 = scmp.ne.s32.totalorder %s86, %s88
    %p95 = scmp.eq.s32.totalorder %s15, 1
    %p96 = por %p94, %p95
    %p97 = scmp.ne.s32.totalorder %s88, %s89
    %p98 = scmp.eq.s32.totalorder %s15, 0
    %p99 = por %p97, %p98
    %p100 = scmp.ne.s32.totalorder %s88, %s89
    %p101 = scmp.eq.s32.totalorder %s16, 1
    %p102 = por %p100, %p101
    %p104 = scmp.ne.s32.totalorder %s89, %s103
    %p105 = scmp.eq.s32.totalorder %s16, 0
    %p106 = por %p104, %p105
    %s107 = ssub.s32 %s10, %s17
    %p108 = scmp.eq.s32.totalorder %s107, 0
    %s110 = sadd.s32 %s109, 1
    %s111 = scalar_select %p108, %s109, %s110
    %p114 = pneg %p108
    %p115 = scmp.eq.s32.totalorder %s10, 1
    %p116 = por %p114, %p115
    %p117 = scmp.ne.s32.totalorder %s109, %s112
    %p118 = scmp.eq.s32.totalorder %s10, 0
    %p119 = por %p117, %p118
    %p120 = scmp.ne.s32.totalorder %s109, %s112
    %p121 = scmp.eq.s32.totalorder %s15, 1
    %p122 = por %p120, %p121
    %p123 = scmp.ne.s32.totalorder %s112, %s113
    %p124 = scmp.eq.s32.totalorder %s15, 0
    %p125 = por %p123, %p124
    %p126 = scmp.ne.s32.totalorder %s112, %s113
    %p127 = scmp.eq.s32.totalorder %s16, 1
    %p128 = por %p126, %p127
    %p130 = scmp.ne.s32.totalorder %s113, %s129
    %p131 = scmp.eq.s32.totalorder %s16, 0
    %p132 = por %p130, %p131
    %p133 = scmp.le.s32.totalorder 1, %s10
    %p134 = scmp.lt.s32.totalorder %s10, 3
    %p135 = pnand %p133, %p134
    %p136 = pneg %p135
    // Predicated region
    $region9: #{conv_block_forward.1} parent=5 // pred_check
      _
    $region10: #{conv_block_forward.1} parent=5 // pred_check_branch
      %138 = sbr.rel (%p135) target = $region12
    $region11: #{conv_block_forward.1} parent=5 // pred_region
      %s139 = ssub.s32 %s10, 1
      // Predicated region
      $region13: #{conv_block_forward.1} parent=11 // pred_check
        %p140 = pneg %p57
      $region14: #{conv_block_forward.1} parent=11 // pred_check_branch
        %142 = sbr.rel (%p140) target = $region16
      $region15: #{conv_block_forward.1} parent=11 // pred_region
        _
      $region16: #{conv_block_forward.1} parent=11 // pred_fallthru
        _
      // Predicated region
      $region17: #{conv_block_forward.1} parent=11 // pred_check
        %p143 = pneg %p78
      $region18: #{conv_block_forward.1} parent=11 // pred_check_branch
        %145 = sbr.rel (%p143) target = $region20
      $region19: #{conv_block_forward.1} parent=11 // pred_region
        _
      $region20: #{conv_block_forward.1} parent=11 // pred_fallthru
        _
      // Predicated region
      $region21: #{conv_block_forward.1} parent=11 // pred_check
        %p146 = pneg %p99
      $region22: #{conv_block_forward.1} parent=11 // pred_check_branch
        %148 = sbr.rel (%p146) target = $region24
      $region23: #{conv_block_forward.1} parent=11 // pred_region
        _
      $region24: #{conv_block_forward.1} parent=11 // pred_fallthru
        _
    $region12: #{conv_block_forward.1} parent=5 // pred_fallthru
      _
    %p149 = scmp.lt.s32.totalorder %s10, 2
    // Predicated region
    $region25: #{conv_block_forward.1} parent=5 // pred_check
      %p150 = pneg %p149
    $region26: #{conv_block_forward.1} parent=5 // pred_check_branch
      %152 = sbr.rel (%p150) target = $region28
    $region27: #{conv_block_forward.1} parent=5 // pred_region
      // Predicated region
      $region29: #{conv_block_forward.1} parent=27 // pred_check
        %p153 = pneg %p30
      $region30: #{conv_block_forward.1} parent=27 // pred_check_branch
        %155 = sbr.rel (%p153) target = $region32
      $region31: #{conv_block_forward.1} parent=27 // pred_region
        %p156 = scmp.lt.s32.totalorder %s10, 1
        %s157 = scalar_select %p156, %s10, 1
        %s158 = smul.addr %s157, 2
        %s159 = smul.addr %s158, 4
        %s160 = scalar_lea.vmem %s0, %s159
      $region32: #{conv_block_forward.1} parent=27 // pred_fallthru
        _
    $region28: #{conv_block_forward.1} parent=5 // pred_fallthru
      _
    %p161 = scmp.le.s32.totalorder 1, %s10
    %p162 = scmp.lt.s32.totalorder %s10, 3
    %p163 = pnand %p161, %p162
    %p164 = pneg %p163
    // Predicated region
    $region33: #{conv_block_forward.1} parent=5 // pred_check
      _
    $region34: #{conv_block_forward.1} parent=5 // pred_check_branch
      %166 = sbr.rel (%p163) target = $region36
    $region35: #{conv_block_forward.1} parent=5 // pred_region
      %s167 = ssub.s32 %s10, 1
      %p168 = scmp.lt.s32.totalorder %s15, 1
      %s169 = scalar_select %p168, %s15, 1
      %s170 = smul.addr %s169, 2
      %s171 = smul.addr %s170, 4
      %s172 = scalar_lea.vmem %s0, %s171
      %p173 = pneg %p36
      %p174 = pneg %p33
      %p175 = pneg %p57
      %p176 = pneg %p54
      %p177 = pneg %p78
      %p178 = pneg %p75
      %p179 = pneg %p99
      %p180 = pneg %p96
      %p181 = pneg %p125
      %p182 = pneg %p122
      %p183 = scmp.lt.s32.totalorder %s15, 1
      %s184 = scalar_select %p183, %s15, 1
      %s185 = smul.addr %s184, 2
      %s186 = smul.addr %s185, 8
      %s187 = scalar_lea.vmem %s4, %s186
      %p188 = scmp.lt.s32.totalorder %s15, 1
      %s189 = scalar_select %p188, %s15, 1
      %s190 = smul.addr %s189, 2
      %s191 = smul.addr %s190, 4
      %s192 = scalar_lea.vmem %s0, %s191
      %p193 = scmp.lt.s32.totalorder %s15, 1
      %s194 = scalar_select %p193, %s15, 1
      %s195 = smul.addr %s194, 2
      %s196 = smul.addr %s195, 8
      %s197 = scalar_lea.vmem %s4, %s196
      %v198 = vld [vmem:[%s192] sm:$0xff]
      %v200 = vcombine.high %v198, %v198
      %202 = vrot.lane.b32.xlu0 %v198, 17
      %v203 = vpop.permute.xlu0 %202
      %204 = vrot.lane.b32.xlu0 %v200, 17
      %v205 = vpop.permute.xlu0 %204
      %v206 = vlaneseq
      %v207 = vand.u32 %v206, 127
      %vm208 = vcmp.lt.s32.totalorder %v207, 17
      %v209 = vsel %vm208, %v203, %v205
      %v210 = vsel %vm208, %v205, %v203
      %v211 = vld [vmem:[%s3] sm:$0x3]
      %v213 = vlaneseq
      %v214 = vshrl.u32 %v213, 7
      %v215 = vsub.s32 0, %v214
      %v216 = vrot.slane %v211, %v215
      %v217 = vlaneseq
      %v218 = vshrl.u32 %v217, 7
      %v219 = vsub.s32 1, %v218
      %v220 = vrot.slane %v211, %v219
      %v223 = vmul.f32 %v210, %v216
      %v224 = vmul.f32 %v209, %v220
      %vm225 = vcmask 1043456
      %v226 = vsel %vm225, %v223, 0.0
      %v227 = vsel %vm225, %v224, 0.0
      %228 = vst [vmem:[#allocation2] sm:$0xff] %v226
      %229 = vst [vmem:[#allocation2 + $0x8] sm:$0xff] %v227
      %230 = vrot.lane.b32.xlu0 %v198, 16
      %v231 = vpop.permute.xlu0 %230
      %232 = vrot.lane.b32.xlu0 %v200, 16
      %v233 = vpop.permute.xlu0 %232
      %vm234 = vcmp.lt.s32.totalorder %v207, 16
      %v235 = vsel %vm234, %v231, %v233
      %v236 = vsel %vm234, %v233, %v231
      %s237 = scalar_lea.vmem %s3, 2
      %v238 = vld [vmem:[%s237] sm:$0x3]
      %v240 = vlaneseq
      %v241 = vshrl.u32 %v240, 7
      %v242 = vsub.s32 0, %v241
      %v243 = vrot.slane %v238, %v242
      %v244 = vlaneseq
      %v245 = vshrl.u32 %v244, 7
      %v246 = vsub.s32 1, %v245
      %v247 = vrot.slane %v238, %v246
      %v250 = vmul.f32 %v236, %v243
      %v251 = vmul.f32 %v235, %v247
      %v252 = vsel %vm225, %v250, 0.0
      %v253 = vsel %vm225, %v251, 0.0
      %254 = vst [vmem:[#allocation2 + $0x10] sm:$0xff] %v252
      %255 = vst [vmem:[#allocation2 + $0x18] sm:$0xff] %v253
      %256 = vrot.lane.b32.xlu0 %v198, 15
      %v257 = vpop.permute.xlu0 %256
      %258 = vrot.lane.b32.xlu0 %v200, 15
      %v259 = vpop.permute.xlu0 %258
      %vm260 = vcmp.lt.s32.totalorder %v207, 15
      %v261 = vsel %vm260, %v257, %v259
      %v262 = vsel %vm260, %v259, %v257
      %s263 = scalar_lea.vmem %s3, 4
      %v264 = vld [vmem:[%s263] sm:$0x3]
      %v266 = vlaneseq
      %v267 = vshrl.u32 %v266, 7
      %v268 = vsub.s32 0, %v267
      %v269 = vrot.slane %v264, %v268
      %v270 = vlaneseq
      %v271 = vshrl.u32 %v270, 7
      %v272 = vsub.s32 1, %v271
      %v273 = vrot.slane %v264, %v272
      %v276 = vmul.f32 %v262, %v269
      %v277 = vmul.f32 %v261, %v273
      %v278 = vsel %vm225, %v276, 0.0
      %v279 = vsel %vm225, %v277, 0.0
      %280 = vst [vmem:[#allocation2 + $0x20] sm:$0xff] %v278
      %281 = vst [vmem:[#allocation2 + $0x28] sm:$0xff] %v279
      %282 = vrot.lane.b32.xlu0 %v198, 1
      %v283 = vpop.permute.xlu0 %282
      %284 = vrot.lane.b32.xlu0 %v200, 1
      %v285 = vpop.permute.xlu0 %284
      %vm286 = vcmp.lt.s32.totalorder %v207, 1
      %v287 = vsel %vm286, %v283, %v285
      %v288 = vsel %vm286, %v285, %v283
      %s289 = scalar_lea.vmem %s3, 6
      %v290 = vld [vmem:[%s289] sm:$0x3]
      %v292 = vlaneseq
      %v293 = vshrl.u32 %v292, 7
      %v294 = vsub.s32 0, %v293
      %v295 = vrot.slane %v290, %v294
      %v296 = vlaneseq
      %v297 = vshrl.u32 %v296, 7
      %v298 = vsub.s32 1, %v297
      %v299 = vrot.slane %v290, %v298
      %v302 = vmul.f32 %v288, %v295
      %v303 = vmul.f32 %v287, %v299
      %v304 = vsel %vm225, %v302, 0.0
      %v305 = vsel %vm225, %v303, 0.0
      %306 = vst [vmem:[#allocation2 + $0x30] sm:$0xff] %v304
      %307 = vst [vmem:[#allocation2 + $0x38] sm:$0xff] %v305
      %v308 = vsel %vm225, %v198, 0.0
      %v309 = vsel %vm225, %v200, 0.0
      %310 = vst [vmem:[#allocation2 + $0x40] sm:$0xff] %v308
      %311 = vst [vmem:[#allocation2 + $0x48] sm:$0xff] %v309
      %312 = vrot.lane.b32.xlu0 %v198, 127
      %v313 = vpop.permute.xlu0 %312
      %314 = vrot.lane.b32.xlu0 %v200, 127
      %v315 = vpop.permute.xlu0 %314
      %vm316 = vcmp.lt.s32.totalorder %v207, 127
      %v317 = vsel %vm316, %v313, %v315
      %v318 = vsel %vm316, %v315, %v313
      %s319 = scalar_lea.vmem %s3, 10
      %v320 = vld [vmem:[%s319] sm:$0x3]
      %v322 = vlaneseq
      %v323 = vshrl.u32 %v322, 7
      %v324 = vsub.s32 0, %v323
      %v325 = vrot.slane %v320, %v324
      %v326 = vlaneseq
      %v327 = vshrl.u32 %v326, 7
      %v328 = vsub.s32 1, %v327
      %v329 = vrot.slane %v320, %v328
      %v332 = vmul.f32 %v317, %v325
      %v333 = vmul.f32 %v318, %v329
      %v334 = vsel %vm225, %v332, 0.0
      %v335 = vsel %vm225, %v333, 0.0
      %336 = vst [vmem:[#allocation2 + $0x50] sm:$0xff] %v334
      %337 = vst [vmem:[#allocation2 + $0x58] sm:$0xff] %v335
      %338 = vrot.lane.b32.xlu0 %v198, 113
      %v339 = vpop.permute.xlu0 %338
      %340 = vrot.lane.b32.xlu0 %v200, 113
      %v341 = vpop.permute.xlu0 %340
      %vm342 = vcmp.lt.s32.totalorder %v207, 113
      %v343 = vsel %vm342, %v339, %v341
      %v344 = vsel %vm342, %v341, %v339
      %s345 = scalar_lea.vmem %s3, 12
      %v346 = vld [vmem:[%s345] sm:$0x3]
      %v348 = vlaneseq
      %v349 = vshrl.u32 %v348, 7
      %v350 = vsub.s32 0, %v349
      %v351 = vrot.slane %v346, %v350
      %v352 = vlaneseq
      %v353 = vshrl.u32 %v352, 7
      %v354 = vsub.s32 1, %v353
      %v355 = vrot.slane %v346, %v354
      %v358 = vmul.f32 %v343, %v351
      %v359 = vmul.f32 %v344, %v355
      %v360 = vsel %vm225, %v358, 0.0
      %v361 = vsel %vm225, %v359, 0.0
      %362 = vst [vmem:[#allocation2 + $0x60] sm:$0xff] %v360
      %363 = vst [vmem:[#allocation2 + $0x68] sm:$0xff] %v361
      %364 = vrot.lane.b32.xlu0 %v198, 112
      %v365 = vpop.permute.xlu0 %364
      %366 = vrot.lane.b32.xlu0 %v200, 112
      %v367 = vpop.permute.xlu0 %366
      %vm368 = vcmp.lt.s32.totalorder %v207, 112
      %v369 = vsel %vm368, %v365, %v367
      %v370 = vsel %vm368, %v367, %v365
      %s371 = scalar_lea.vmem %s3, 14
      %v372 = vld [vmem:[%s371] sm:$0x3]
      %v374 = vlaneseq
      %v375 = vshrl.u32 %v374, 7
      %v376 = vsub.s32 0, %v375
      %v377 = vrot.slane %v372, %v376
      %v378 = vlaneseq
      %v379 = vshrl.u32 %v378, 7
      %v380 = vsub.s32 1, %v379
      %v381 = vrot.slane %v372, %v380
      %v384 = vmul.f32 %v369, %v377
      %v385 = vmul.f32 %v370, %v381
      %v386 = vsel %vm225, %v384, 0.0
      %v387 = vsel %vm225, %v385, 0.0
      %388 = vst [vmem:[#allocation2 + $0x70] sm:$0xff] %v386
      %389 = vst [vmem:[#allocation2 + $0x78] sm:$0xff] %v387
      %390 = vrot.lane.b32.xlu0 %v198, 111
      %v391 = vpop.permute.xlu0 %390
      %392 = vrot.lane.b32.xlu0 %v200, 111
      %v393 = vpop.permute.xlu0 %392
      %vm394 = vcmp.lt.s32.totalorder %v207, 111
      %v395 = vsel %vm394, %v391, %v393
      %v396 = vsel %vm394, %v393, %v391
      %s397 = scalar_lea.vmem %s3, 16
      %v398 = vld [vmem:[%s397] sm:$0x3]
      %v400 = vlaneseq
      %v401 = vshrl.u32 %v400, 7
      %v402 = vsub.s32 0, %v401
      %v403 = vrot.slane %v398, %v402
      %v404 = vlaneseq
      %v405 = vshrl.u32 %v404, 7
      %v406 = vsub.s32 1, %v405
      %v407 = vrot.slane %v398, %v406
      %v410 = vmul.f32 %v395, %v403
      %v411 = vmul.f32 %v396, %v407
      %v412 = vsel %vm225, %v410, 0.0
      %v413 = vsel %vm225, %v411, 0.0
      %414 = vst [vmem:[#allocation2 + $0x80] sm:$0xff] %v412
      %415 = vst [vmem:[#allocation2 + $0x88] sm:$0xff] %v413
      %v416 = vld [vmem:[%s1] sm:$0xff]
      %v417 = vld [vmem:[#allocation2] sm:$0xff]
      %v418 = vld [vmem:[#allocation2 + $0x8] sm:$0xff]
      %v419 = vld [vmem:[#allocation2 + $0x10] sm:$0xff]
      %v420 = vld [vmem:[#allocation2 + $0x18] sm:$0xff]
      %v421 = vld [vmem:[#allocation2 + $0x20] sm:$0xff]
      %v422 = vld [vmem:[#allocation2 + $0x28] sm:$0xff]
      %v423 = vld [vmem:[#allocation2 + $0x30] sm:$0xff]
      %v424 = vld [vmem:[#allocation2 + $0x38] sm:$0xff]
      %v425 = vld [vmem:[#allocation2 + $0x40] sm:$0xff]
      %v426 = vld [vmem:[#allocation2 + $0x48] sm:$0xff]
      %v427 = vld [vmem:[#allocation2 + $0x50] sm:$0xff]
      %v428 = vld [vmem:[#allocation2 + $0x58] sm:$0xff]
      %v429 = vld [vmem:[#allocation2 + $0x60] sm:$0xff]
      %v430 = vld [vmem:[#allocation2 + $0x68] sm:$0xff]
      %v431 = vld [vmem:[#allocation2 + $0x70] sm:$0xff]
      %v432 = vld [vmem:[#allocation2 + $0x78] sm:$0xff]
      %v433 = vld [vmem:[#allocation2 + $0x80] sm:$0xff]
      %v434 = vld [vmem:[#allocation2 + $0x88] sm:$0xff]
      %v435 = vld [vmem:[%s2] sm:$0xff]
      %437 = vset.pattern.permute.xlu0 0
      %438 = vperm.xlu0 %437, %v435
      %v439 = vpop.permute.xlu0 %438
      %vm441 = vcmask 588800
      %v443 = vsel %vm441, %v416, 0
      %445 = vmatprep.subr.mxu0 %v418
      %446 = vmatpush1.msra.mxu0 %v417
      %447 = vmatprep.subr.mxu0 %v420
      %448 = vmatpush1.msra.mxu0 %v419
      %449 = vmatprep.subr.mxu0 %v422
      %450 = vmatpush1.msra.mxu0 %v421
      %451 = vmatprep.subr.mxu0 %v424
      %452 = vmatpush1.msra.mxu0 %v423
      %453 = vmatprep.subr.mxu0 %v426
      %454 = vmatpush1.msra.mxu0 %v425
      %455 = vmatprep.subr.mxu0 %v428
      %456 = vmatpush1.msra.mxu0 %v427
      %457 = vmatprep.subr.mxu0 %v430
      %458 = vmatpush1.msra.mxu0 %v429
      %459 = vmatprep.subr.mxu0 %v432
      %460 = vmatpush1.msra.mxu0 %v431
      %461 = vmatprep.subr.mxu0 %v434
      %462 = vmatpush1.msra.mxu0 %v433
      %463 = vmatprep.subr.mxu0 0.0
      %464 = vmatpush1.msra.mxu0 0.0
      %465 = vmatprep.subr.mxu0 0.0
      %466 = vmatpush1.msra.mxu0 0.0
      %467 = vmatprep.subr.mxu0 0.0
      %468 = vmatpush1.msra.mxu0 0.0
      %469 = vmatprep.subr.mxu0 0.0
      %470 = vmatpush1.msra.mxu0 0.0
      %471 = vmatprep.subr.mxu0 0.0
      %472 = vmatpush1.msra.mxu0 0.0
      %473 = vmatprep.subr.mxu0 0.0
      %474 = vmatpush1.msra.mxu0 0.0
      %475 = vmatprep.subr.mxu0 0.0
      %476 = vmatpush1.msra.mxu0 0.0
      %477 = vmatprep.subr.mxu0 0.0
      %478 = vmatpush1.msra.mxu0 0.0
      %479 = vmatprep.subr.mxu0 0.0
      %480 = vmatpush1.msra.mxu0 0.0
      %481 = vmatprep.subr.mxu0 0.0
      %482 = vmatpush1.msra.mxu0 0.0
      %483 = vmatprep.subr.mxu0 0.0
      %484 = vmatpush1.msra.mxu0 0.0
      %485 = vmatprep.subr.mxu0 0.0
      %486 = vmatpush1.msra.mxu0 0.0
      %487 = vmatprep.subr.mxu0 0.0
      %488 = vmatpush1.msra.mxu0 0.0
      %489 = vmatprep.subr.mxu0 0.0
      %490 = vmatpush1.msra.mxu0 0.0
      %491 = vmatprep.subr.mxu0 0.0
      %492 = vmatpush1.msra.mxu0 0.0
      %493 = vmatprep.subr.mxu0 0.0
      %494 = vmatpush1.msra.mxu0 0.0
      %495 = vmatprep.subr.mxu0 0.0
      %496 = vmatpush1.msra.mxu0 0.0
      %497 = vmatprep.subr.mxu0 0.0
      %498 = vmatpush1.msra.mxu0 0.0
      %499 = vmatprep.subr.mxu0 0.0
      %500 = vmatpush1.msra.mxu0 0.0
      %501 = vmatprep.subr.mxu0 0.0
      %502 = vmatpush1.msra.mxu0 0.0
      %503 = vmatprep.subr.mxu0 0.0
      %504 = vmatpush1.msra.mxu0 0.0
      %505 = vmatprep.subr.mxu0 0.0
      %506 = vmatpush1.msra.mxu0 0.0
      %507 = vmatprep.subr.mxu0 0.0
      %508 = vmatpush1.msra.mxu0 0.0
      %509 = vmatprep.mubr.f32.mxu0 0.0
      %510 = vmatmul.mubr.f32.gmra.mrb[0].mxu0 %v443
      %v511 = vpop.f32.mrb[0].mxu0
      %v512 = vadd.f32 %v439, %v511
      %v513 = vpop.f32.mrb[0].mxu0
      %v514 = vadd.f32 %v439, %v513
      %515 = vdwg.mxu0
      %v516 = vmax.f32 %v512, 0.0
      %v517 = vmax.f32 %v514, 0.0
      %518 = vst [vmem:[%s197] sm:$0xff] %v516
      %519 = vst [vmem:[%s197 + $0x8] sm:$0xff] %v517
      %p520 = scmp.lt.s32.totalorder %s15, 1
      %s521 = scalar_select %p520, %s15, 1
      %s522 = smul.addr %s521, 2
      %s523 = smul.addr %s522, 8
      %s524 = scalar_lea.vmem %s4, %s523
      // Predicated region
      $region37: #{conv_block_forward.1} parent=35 // pred_check
        %p525 = pneg %p122
      $region38: #{conv_block_forward.1} parent=35 // pred_check_branch
        %527 = sbr.rel (%p525) target = $region40
      $region39: #{conv_block_forward.1} parent=35 // pred_region
        _
      $region40: #{conv_block_forward.1} parent=35 // pred_fallthru
        _
    $region36: #{conv_block_forward.1} parent=5 // pred_fallthru
      _
    %p528 = scmp.le.s32.totalorder 2, %s10
    // Predicated region
    $region41: #{conv_block_forward.1} parent=5 // pred_check
      %p529 = pneg %p528
    $region42: #{conv_block_forward.1} parent=5 // pred_check_branch
      %531 = sbr.rel (%p529) target = $region44
    $region43: #{conv_block_forward.1} parent=5 // pred_region
      %s532 = ssub.s32 %s10, 2
      // Predicated region
      $region45: #{conv_block_forward.1} parent=43 // pred_check
        %p533 = pneg %p128
      $region46: #{conv_block_forward.1} parent=43 // pred_check_branch
        %535 = sbr.rel (%p533) target = $region48
      $region47: #{conv_block_forward.1} parent=43 // pred_region
        %p536 = scmp.lt.s32.totalorder %s16, 1
        %s537 = scalar_select %p536, %s16, 1
        %s538 = smul.addr %s537, 2
        %s539 = smul.addr %s538, 8
        %s540 = scalar_lea.vmem %s4, %s539
      $region48: #{conv_block_forward.1} parent=43 // pred_fallthru
        _
    $region44: #{conv_block_forward.1} parent=5 // pred_fallthru
      _
  $region6: #{conv_block_forward.1} parent=0 // loop_footer
    %s14 = sadd.s32 1, %s10
  $region7: #{conv_block_forward.1} parent=0 // loop_footer_branch
    %9 = sbr.rel target = $region3
  $region8: #{conv_block_forward.1} parent=0 // loop_exit
    _

</llo_original>
